<compile_context>
chip_gen: v7x
topology: tpu7x:2x2x1
jax: 0.10.0
libtpu: 0.0.40
codegen_flags: <defaults>
</compile_context>

<pallas_src>
import functools

import jax
import jax.numpy as jnp
from jax.experimental import pallas as pl
from jax.experimental.pallas import tpu as pltpu


# ---------------------------------------------------------------------------
# Kernel
# ---------------------------------------------------------------------------
def fcn_head_kernel(x_ref, w1_ref, shift_ref, w2_ref, o_ref, acc_ref):
    """Grid step (n, w_blk, h_blk): stream one (C_in, block_h, block_w) x tile
    and accumulate  acc(C_mid, block_w) += w1_scaled @ sum_h(x)  (first 1x1
    conv hidden under the DMA of the next tile).  On the last H step apply the
    folded BN shift + ReLU and the second 1x1 conv."""
    h_step = pl.program_id(2)

    @pl.when(h_step == 0)
    def _init():
        acc_ref[...] = jnp.zeros_like(acc_ref)

    x = x_ref[0].astype(jnp.float32)                 # (C_in, block_h, block_w)
    xs = jnp.sum(x, axis=1)                          # (C_in, block_w) partial H-sum
    # Conv2d 1x1 #1 (BN scale and 1/H folded into w1), accumulated per H tile.
    acc_ref[...] += jnp.dot(w1_ref[...], xs, preferred_element_type=jnp.float32)

    @pl.when(h_step == pl.num_programs(2) - 1)
    def _finalize():
        # BatchNorm2d shift + ReLU (scale already folded into w1).
        h = jnp.maximum(acc_ref[...] + shift_ref[...], 0.0)      # (C_mid, block_w)
        # Dropout(0.1) is identity in eval mode.
        # TODO(synk): training-mode dropout (random mask) is not implemented.
        y = jnp.dot(w2_ref[...], h, preferred_element_type=jnp.float32)  # (C_out, block_w)
        o_ref[...] = y[None].astype(o_ref.dtype)


# ---------------------------------------------------------------------------
# Generation-aware tiling helpers
# ---------------------------------------------------------------------------
def _vmem_capacity_bytes():
    try:
        return int(pltpu.get_tpu_info().vmem_capacity_bytes)
    except Exception:                               # conservative default (v5e/v6e)
        return 128 * 1024 * 1024


def _pad_rc_bytes(rows, cols, itemsize=4):
    r = ((max(rows, 1) + 7) // 8) * 8
    c = ((max(cols, 1) + 127) // 128) * 128
    return r * c * itemsize


def _x_tile_bytes(c_in, block_h, block_w, itemsize):
    bh = ((max(block_h, 1) + 7) // 8) * 8
    bw = ((max(block_w, 1) + 127) // 128) * 128
    return c_in * bh * bw * itemsize


def _fixed_vmem_bytes(c_in, c_mid, c_out, block_w, weight_buffers):
    weights = weight_buffers * (_pad_rc_bytes(c_mid, c_in)
                                + _pad_rc_bytes(c_out, c_mid)
                                + _pad_rc_bytes(c_mid, 1))
    acc = _pad_rc_bytes(c_mid, block_w)
    out = 2 * _pad_rc_bytes(c_out, block_w)
    return weights + acc + out


def _choose_tiles(c_in, h, w, x_itemsize, x_budget_per_buf, prefer_w_split):
    """Pick (block_h, block_w) jointly against the per-buffer x budget."""
    # block_w candidates: full W, or lane-aligned (multiple-of-128) divisors.
    if w % 128 == 0 and w > 128:
        w_cands = [d for d in range(w, 127, -128) if w % d == 0]
    else:
        w_cands = [w]
    if prefer_w_split and len(w_cands) > 1 and w_cands[1] >= 256:
        # Try a split-W tiling first so the second TensorCore (v7x) gets work
        # when N == 1; per-channel DMA segments stay >= 1 KiB (>=256 lanes).
        w_cands = w_cands[1:] + w_cands[:1]

    # block_h candidates: full H first, then multiple-of-8 divisors, descending.
    h_cands = [h]
    d = h - 1
    while d >= 8:
        if h % d == 0 and d % 8 == 0:
            h_cands.append(d)
        d -= 1

    for bw in w_cands:                       # prefer big, contiguous W runs
        for bh in h_cands:                   # then the biggest H tile that fits
            if _x_tile_bytes(c_in, bh, bw, x_itemsize) <= x_budget_per_buf:
                return bh, bw
    # Nothing fits the per-buffer budget (extreme C_in*W): smallest expressible
    # tile; the scoped vmem_limit below stretches toward physical VMEM.
    # TODO(synk): add a C_in-tiling grid axis (partial accumulators) for shapes
    # where even a (C_in, 8, 128) tile exceeds the VMEM budget.
    return h_cands[-1], w_cands[-1]


def _const_spec(shape, single_buffer):
    """BlockSpec for a grid-invariant (constant index_map) input; on small-VMEM
    parts (v7x) request single buffering so the weights aren't double-buffered."""
    index_map = lambda i, j, k: tuple(0 for _ in shape)
    if single_buffer:
        try:
            return pl.BlockSpec(shape, index_map, pipeline_mode=pl.Buffered(1))
        except Exception:
            pass
    return pl.BlockSpec(shape, index_map)


# ---------------------------------------------------------------------------
# Wrapper
# ---------------------------------------------------------------------------
@functools.partial(jax.jit,
                   static_argnames=("eps", "block_h", "block_w", "stream_dtype"))
def fcn_head_forward(x, w1, bn_gamma, bn_beta, bn_mean, bn_var, w2,
                     *, eps=1e-5, block_h=None, block_w=None, stream_dtype=None):
    """x: (N, C_in, H, W) NCHW.  Returns (N, C_out, 1, W) float32.

    stream_dtype: optional narrower dtype (e.g. jnp.bfloat16) used to stream x
    through HBM (the kernel is HBM-bound on x); all in-kernel math stays f32."""
    n, c_in, h, w = x.shape
    c_mid, _ = w1.shape
    c_out, _ = w2.shape

    if stream_dtype is not None and x.dtype != jnp.dtype(stream_dtype):
        # Ideally the upstream producer already emits this dtype; this cast just
        # exercises the halved-bandwidth streaming path.
        x = x.astype(stream_dtype)
    x_itemsize = jnp.dtype(x.dtype).itemsize

    # ---- generation-aware VMEM budgeting ---------------------------------
    vmem_cap = _vmem_capacity_bytes()              # 128 MiB v5e/v6e, 64 MiB v7x
    cap = (vmem_cap * 3) // 4                      # ~96 MiB / ~48 MiB scoped budget
    single_buffer_weights = vmem_cap <= 80 * 1024 * 1024     # v7x-class parts
    weight_buffers = 1 if single_buffer_weights else 2
    headroom = 4 * 1024 * 1024
    fixed_hi = _fixed_vmem_bytes(c_in, c_mid, c_out, w, weight_buffers)
    x_budget = max(1 << 20, (cap - fixed_hi - headroom) // 2)  # per x buffer (x2-buffered)

    auto_bh, auto_bw = _choose_tiles(
        c_in, h, w, x_itemsize, x_budget,
        prefer_w_split=(single_buffer_weights and n == 1))
    if block_h is None:
        block_h = auto_bh
    if block_w is None:
        block_w = auto_bw
    if h % block_h != 0:
        raise ValueError(f"block_h={block_h} must divide H={h}")
    if w % block_w != 0 or not (block_w == w or block_w % 128 == 0):
        raise ValueError(f"block_w={block_w} must divide W={w} and be lane-aligned")

    # ---- fold BN (inference) + 1/H pooling into the first conv ------------
    inv_std = 1.0 / jnp.sqrt(bn_var.astype(jnp.float32) + eps)
    scale = bn_gamma.astype(jnp.float32) * inv_std                      # (C_mid,)
    shift = (bn_beta.astype(jnp.float32)
             - bn_mean.astype(jnp.float32) * scale).reshape(c_mid, 1)   # (C_mid, 1)
    w1_scaled = jnp.asarray(w1, jnp.float32) * (scale[:, None] / h)     # (C_mid, C_in)
    w2_f = jnp.asarray(w2, jnp.float32)                                 # (C_out, C_mid)

    # ---- scoped VMEM limit derived from the chosen tiling -----------------
    x_tile = _x_tile_bytes(c_in, block_h, block_w, x_itemsize)
    est = 2 * x_tile + _fixed_vmem_bytes(c_in, c_mid, c_out, block_w, weight_buffers)
    vmem_limit = int(max(16 * 1024 * 1024,
                         min(vmem_cap - (2 << 20), est + headroom)))

    out3 = pl.pallas_call(
        fcn_head_kernel,
        out_shape=jax.ShapeDtypeStruct((n, c_out, w), jnp.float32),
        grid_spec=pltpu.PrefetchScalarGridSpec(
            num_scalar_prefetch=0,
            grid=(n, w // block_w, h // block_h),
            in_specs=[
                pl.BlockSpec((1, c_in, block_h, block_w),
                             lambda i, j, k: (i, 0, k, j)),
                _const_spec((c_mid, c_in), single_buffer_weights),
                _const_spec((c_mid, 1), single_buffer_weights),
                _const_spec((c_out, c_mid), single_buffer_weights),
            ],
            out_specs=pl.BlockSpec((1, c_out, block_w), lambda i, j, k: (i, 0, j)),
            scratch_shapes=[pltpu.VMEM((c_mid, block_w), jnp.float32)],
        ),
        compiler_params=pltpu.CompilerParams(
            dimension_semantics=("parallel", "parallel", "arbitrary"),
            vmem_limit_bytes=vmem_limit,
        ),
    )(x, w1_scaled, shift, w2_f)

    return out3.reshape(n, c_out, 1, w)


# ---------------------------------------------------------------------------
# Pure-JAX reference
# ---------------------------------------------------------------------------
def fcn_head_reference(x, w1, bn_gamma, bn_beta, bn_mean, bn_var, w2, eps=1e-5):
    pooled = jnp.mean(x, axis=2, keepdims=True)                        # (N,C_in,1,W)
    h = jnp.einsum('oc,nchw->nohw', w1, pooled)                        # (N,C_mid,1,W)
    scale = (bn_gamma / jnp.sqrt(bn_var + eps)).reshape(1, -1, 1, 1)
    shift = (bn_beta - bn_mean * bn_gamma / jnp.sqrt(bn_var + eps)).reshape(1, -1, 1, 1)
    h = jnp.maximum(h * scale + shift, 0.0)
    return jnp.einsum('om,nmhw->nohw', w2, h)                          # (N,C_out,1,W)


if __name__ == "__main__":
    # Small shapes consistent with the module: in_channels=8 -> mid=2, channels=4.
    N, C_IN, H, W = 2, 8, 16, 16
    C_MID = C_IN // 4
    C_OUT = 4

    key = jax.random.PRNGKey(0)
    kx, kw1, kw2 = jax.random.split(key, 3)

    x = jax.random.normal(kx, (N, C_IN, H, W), dtype=jnp.float32)

    # Deterministic synthetic parameters (no checkpoint load).
    w1 = jax.random.normal(kw1, (C_MID, C_IN), dtype=jnp.float32) * 0.1
    w2 = jax.random.normal(kw2, (C_OUT, C_MID), dtype=jnp.float32) * 0.1
    bn_gamma = jnp.linspace(0.9, 1.1, C_MID, dtype=jnp.float32)
    bn_beta = jnp.linspace(-0.1, 0.1, C_MID, dtype=jnp.float32)
    bn_mean = jnp.linspace(-0.05, 0.05, C_MID, dtype=jnp.float32)
    bn_var = jnp.linspace(0.8, 1.2, C_MID, dtype=jnp.float32)

    ref = fcn_head_reference(x, w1, bn_gamma, bn_beta, bn_mean, bn_var, w2)

    # 1) Explicit multi-step H reduction (block_h=8 -> 2 reduction steps).
    out = fcn_head_forward(x, w1, bn_gamma, bn_beta, bn_mean, bn_var, w2, block_h=8)
    out = jax.block_until_ready(out)
    assert out.shape == (N, C_OUT, 1, W), out.shape
    assert jnp.allclose(out, ref, atol=1e-5, rtol=1e-5), "mismatch vs reference (block_h=8)"

    # 2) Auto-picked, generation-aware tiling (single H step at this toy size).
    out2 = jax.block_until_ready(
        fcn_head_forward(x, w1, bn_gamma, bn_beta, bn_mean, bn_var, w2))
    assert jnp.allclose(out2, ref, atol=1e-5, rtol=1e-5), "mismatch vs reference (auto tiles)"

    # 3) bf16-streamed x (halves HBM traffic); in-kernel math stays float32.
    out3 = jax.block_until_ready(
        fcn_head_forward(x, w1, bn_gamma, bn_beta, bn_mean, bn_var, w2,
                         stream_dtype=jnp.bfloat16))
    assert jnp.allclose(out3, ref, atol=2e-2, rtol=2e-2), "mismatch vs reference (bf16 stream)"

    print("KERNEL_OK")
</pallas_src>

<mosaic_0001>
module attributes {stable_mosaic.version = 11 : i64} {
  func.func @fcn_head_kernel(%arg0: i32, %arg1: i32, %arg2: i32, %arg3: memref<1x8x8x16xf32, #tpu.memory_space<vmem>>, %arg4: memref<2x8xf32, #tpu.memory_space<vmem>>, %arg5: memref<2x1xf32, #tpu.memory_space<vmem>>, %arg6: memref<4x2xf32, #tpu.memory_space<vmem>>, %arg7: memref<1x4x16xf32, #tpu.memory_space<vmem>>, %arg8: memref<2x16xf32, #tpu.memory_space<vmem>>) attributes {dimension_semantics = [#tpu.dimension_semantics<parallel>, #tpu.dimension_semantics<parallel>, #tpu.dimension_semantics<arbitrary>], iteration_bounds = array<i64: 2, 1, 2>, scalar_prefetch = 0 : i64, scratch_operands = 1 : i64, tpu.core_type = #tpu.core_type<tc>, window_params = [{transform_indices = @transform_0, window_bounds = array<i64: 1, 8, 8, 16>}, {pipeline_mode = #tpu.pipeline_mode<synchronous>, transform_indices = @transform_1, window_bounds = array<i64: 2, 8>}, {pipeline_mode = #tpu.pipeline_mode<synchronous>, transform_indices = @transform_2, window_bounds = array<i64: 2, 1>}, {pipeline_mode = #tpu.pipeline_mode<synchronous>, transform_indices = @transform_3, window_bounds = array<i64: 4, 2>}, {transform_indices = @transform_4, window_bounds = array<i64: 1, 4, 16>}]} {
    %c0_i32 = arith.constant 0 : i32
    %0 = arith.cmpi eq, %arg2, %c0_i32 : i32
    %1 = arith.extui %0 : i1 to i32
    %c0_i32_0 = arith.constant 0 : i32
    %2 = arith.cmpi ne, %1, %c0_i32_0 : i32
    scf.if %2 {
      %cst_12 = arith.constant 0.000000e+00 : f32
      %14 = vector.broadcast %cst_12 : f32 to vector<2x16xf32>
      %c0_13 = arith.constant 0 : index
      %c0_14 = arith.constant 0 : index
      %15 = vector.load %arg8[%c0_13, %c0_14] : memref<2x16xf32, #tpu.memory_space<vmem>>, vector<2x16xf32>
      tpu.vector_store %arg8[%c0_13, %c0_14], %14 {strides = array<i32>} : memref<2x16xf32, #tpu.memory_space<vmem>>, vector<2x16xf32>,
    } else {
    }
    %c0 = arith.constant 0 : index
    %c0_1 = arith.constant 0 : index
    %c0_2 = arith.constant 0 : index
    %c0_3 = arith.constant 0 : index
    %3 = vector.load %arg3[%c0, %c0_1, %c0_2, %c0_3] : memref<1x8x8x16xf32, #tpu.memory_space<vmem>>, vector<1x8x8x16xf32>
    %4 = vector.shape_cast %3 : vector<1x8x8x16xf32> to vector<8x8x16xf32>
    %cst = arith.constant dense<0.000000e+00> : vector<8x16xf32>
    %5 = vector.multi_reduction <add>, %4, %cst [1] : vector<8x8x16xf32> to vector<8x16xf32>
    %c0_4 = arith.constant 0 : index
    %c0_5 = arith.constant 0 : index
    %6 = vector.load %arg8[%c0_4, %c0_5] : memref<2x16xf32, #tpu.memory_space<vmem>>, vector<2x16xf32>
    %c0_6 = arith.constant 0 : index
    %c0_7 = arith.constant 0 : index
    %7 = vector.load %arg4[%c0_6, %c0_7] : memref<2x8xf32, #tpu.memory_space<vmem>>, vector<2x8xf32>
    %cst_8 = arith.constant dense<0.000000e+00> : vector<2x16xf32>
    %8 = tpu.matmul %7, %5, %cst_8 {dimension_numbers = #tpu.dot_dimension_numbers<[1], [0], [0], [1], [0, 0, 1, 1], [], []>} : vector<2x8xf32>, vector<8x16xf32>, vector<2x16xf32> -> vector<2x16xf32>
    %9 = arith.addf %6, %8 : vector<2x16xf32>
    %c0_9 = arith.constant 0 : index
    %c0_10 = arith.constant 0 : index
    %10 = vector.load %arg8[%c0_9, %c0_10] : memref<2x16xf32, #tpu.memory_space<vmem>>, vector<2x16xf32>
    tpu.vector_store %arg8[%c0_9, %c0_10], %9 {strides = array<i32>} : memref<2x16xf32, #tpu.memory_space<vmem>>, vector<2x16xf32>,
    %c1_i32 = arith.constant 1 : i32
    %11 = arith.cmpi eq, %arg2, %c1_i32 : i32
    %12 = arith.extui %11 : i1 to i32
    %c0_i32_11 = arith.constant 0 : i32
    %13 = arith.cmpi ne, %12, %c0_i32_11 : i32
    scf.if %13 {
      %c0_12 = arith.constant 0 : index
      %c0_13 = arith.constant 0 : index
      %14 = vector.load %arg8[%c0_12, %c0_13] : memref<2x16xf32, #tpu.memory_space<vmem>>, vector<2x16xf32>
      %c0_14 = arith.constant 0 : index
      %c0_15 = arith.constant 0 : index
      %15 = vector.load %arg5[%c0_14, %c0_15] : memref<2x1xf32, #tpu.memory_space<vmem>>, vector<2x1xf32>
      %16 = vector.broadcast %15 : vector<2x1xf32> to vector<2x16xf32>
      %17 = arith.addf %14, %16 : vector<2x16xf32>
      %cst_16 = arith.constant 0.000000e+00 : f32
      %18 = vector.broadcast %cst_16 : f32 to vector<2x16xf32>
      %19 = arith.maximumf %17, %18 : vector<2x16xf32>
      %c0_17 = arith.constant 0 : index
      %c0_18 = arith.constant 0 : index
      %20 = vector.load %arg6[%c0_17, %c0_18] : memref<4x2xf32, #tpu.memory_space<vmem>>, vector<4x2xf32>
      %cst_19 = arith.constant dense<0.000000e+00> : vector<4x16xf32>
      %21 = tpu.matmul %20, %19, %cst_19 {dimension_numbers = #tpu.dot_dimension_numbers<[1], [0], [0], [1], [0, 0, 1, 1], [], []>} : vector<4x2xf32>, vector<2x16xf32>, vector<4x16xf32> -> vector<4x16xf32>
      %22 = vector.shape_cast %21 : vector<4x16xf32> to vector<1x4x16xf32>
      %c0_20 = arith.constant 0 : index
      %c0_21 = arith.constant 0 : index
      %c0_22 = arith.constant 0 : index
      %23 = vector.load %arg7[%c0_20, %c0_21, %c0_22] : memref<1x4x16xf32, #tpu.memory_space<vmem>>, vector<1x4x16xf32>
      tpu.vector_store %arg7[%c0_20, %c0_21, %c0_22], %22 {strides = array<i32>} : memref<1x4x16xf32, #tpu.memory_space<vmem>>, vector<1x4x16xf32>,
    } else {
    }
    return
  }
  func.func @transform_0(%arg0: i32, %arg1: i32, %arg2: i32) -> (i32, i32, i32, i32) {
    %c0_i32 = arith.constant 0 : i32
    %c0_i32_0 = arith.constant 0 : i32
    return %arg0, %c0_i32, %arg2, %arg1 : i32, i32, i32, i32
  }
  func.func @transform_1(%arg0: i32, %arg1: i32, %arg2: i32) -> (i32, i32) {
    %c0_i32 = arith.constant 0 : i32
    %c0_i32_0 = arith.constant 0 : i32
    %c0_i32_1 = arith.constant 0 : i32
    return %c0_i32, %c0_i32_0 : i32, i32
  }
  func.func @transform_2(%arg0: i32, %arg1: i32, %arg2: i32) -> (i32, i32) {
    %c0_i32 = arith.constant 0 : i32
    %c0_i32_0 = arith.constant 0 : i32
    %c0_i32_1 = arith.constant 0 : i32
    return %c0_i32, %c0_i32_0 : i32, i32
  }
  func.func @transform_3(%arg0: i32, %arg1: i32, %arg2: i32) -> (i32, i32) {
    %c0_i32 = arith.constant 0 : i32
    %c0_i32_0 = arith.constant 0 : i32
    %c0_i32_1 = arith.constant 0 : i32
    return %c0_i32, %c0_i32_0 : i32, i32
  }
  func.func @transform_4(%arg0: i32, %arg1: i32, %arg2: i32) -> (i32, i32, i32) {
    %c0_i32 = arith.constant 0 : i32
    %c0_i32_0 = arith.constant 0 : i32
    return %arg0, %c0_i32, %arg1 : i32, i32, i32
  }
}

</mosaic_0001>

<llo_original>
// kernel: fcn_head_forward.1
$region0: #{fcn_head_forward.1}
  #allocation0 [shape = 'u32[]', space=smem, size = 0x4, offset = 0x4, fixed_abs, tag = 'smem constant byte address 0x4 - core index']
  #allocation1 [shape = 'u32[144,128]{1,0:T(1,128)}', space=vmem, size = 0x12000, scoped, tag = 'internal scratch']
  #allocation2 [shape = 'f32[2,16]{1,0:T(2,128)}', space=vmem, size = 0x400, scoped, tag = 'scratch operand']
  %s0 = inlined_call_operand.hbm [shape: f32[2,8,16,16], index: 0, kind: input, shape index: {}]
  %s1 = inlined_call_operand.vmem [shape: f32[2,8], index: 1, kind: input, shape index: {}]
  %s2 = inlined_call_operand.vmem [shape: f32[2,1], index: 2, kind: input, shape index: {}]
  %s3 = inlined_call_operand.vmem [shape: f32[4,2], index: 3, kind: input, shape index: {}]
  %s4 = inlined_call_operand.hbm [shape: f32[2,4,16], index: 4, kind: output, shape index: {}]
  %s5 = sld [smem:[#allocation0]]
  $region61: #{fcn_head_forward.1} parent=0
    _
  %s7 = ssub.s32 1, %s5
  %s8 = scalar_select 0, %s7, %s5
  $region1: #{fcn_head_forward.1} parent=0
    #allocation3 [shape = 'u8[65536]{0}', space=vmem, size = 0x10000, scoped, tag = 'input window, operand 0']
    #allocation4 [shape = 's32[2]{0}', space=sflag, size = 0x8, scoped, tag = 'scoped memory for fcn_head_forward.1']
    #allocation5 [shape = 's32[2]{0}', space=sflag, size = 0x8, scoped, tag = 'scoped memory for fcn_head_forward.1']
    #allocation6 [shape = 'u8[4096]{0}', space=vmem, size = 0x1000, scoped, tag = 'output window, operand 0']
    %9 = vsyncpa [#allocation4], 0
    %s10 = scalar_lea.sflag [#allocation4], 1
    %11 = vsyncpa %s10, 0
    %12 = vsyncpa [#allocation5], 0
    %s13 = scalar_lea.sflag [#allocation5], 1
    %14 = vsyncpa %s13, 0
    loop: start=0, step=1, limit=6
    $region2: #{fcn_head_forward.1} parent=1 // loop_pre_header
      _
    $region3: #{fcn_head_forward.1} parent=1 // loop_header
      %s16 = sphi 0, %s20
      %p17 = scmp.ge.s32.totalorder %s16, 6
      %s23 = sphi 0, %s42
      %s24 = sphi 0, %s38
      %s25 = sphi 0, %s34
      %s26 = sphi 0, %s23
      %s27 = sphi 0, %s24
      %s28 = sphi 0, %s25
      %s29 = sphi 0, %s26
      %s30 = sphi 0, %s27
      %s31 = sphi 0, %s28
      %s49 = sphi 0, %s51
      %s52 = sphi 0, %s49
      %s53 = sphi 0, %s52
      %s69 = sphi 0, %s53
      %s73 = sphi 0, %s73
      %s75 = sphi 0, %s73
      %s76 = sphi 0, %s75
      %s90 = sphi 0, %s76
      %s94 = sphi 0, %s94
      %s96 = sphi 0, %s94
      %s97 = sphi 0, %s96
      %s111 = sphi 0, %s97
      %s115 = sphi 0, %s115
      %s117 = sphi 0, %s115
      %s118 = sphi 0, %s117
      %s132 = sphi 0, %s118
      %s140 = sphi 0, %s142
      %s143 = sphi 0, %s140
      %s144 = sphi 0, %s143
      %s160 = sphi 0, %s144
    $region4: #{fcn_head_forward.1} parent=1 // loop_header_branch
      %19 = sbr.rel (%p17) target = $region8
    $region5: #{fcn_head_forward.1} parent=1 // loop_body
      %s21 = ssub.s32 %s16, 1
      %s22 = ssub.s32 %s16, 2
      %s32 = sadd.s32 1, %s25
      %p33 = scmp.ge.s32.totalorder %s32, 2
      %s34 = scalar_select %p33, 0, %s32
      %s35 = sadd.s32 1, %s24
      %s36 = scalar_select %p33, %s35, %s24
      %p37 = scmp.ge.s32.totalorder %s36, 1
      %s38 = scalar_select %p37, 0, %s36
      %s39 = sadd.s32 1, %s23
      %s40 = scalar_select %p37, %s39, %s23
      %p41 = scmp.ge.s32.totalorder %s40, 2
      %s42 = scalar_select %p41, 0, %s40
      %s43 = ssub.s32 %s23, %s42
      %s44 = ssub.s32 %s25, %s34
      %s45 = sor.u32 %s43, %s44
      %s46 = ssub.s32 %s24, %s38
      %s47 = sor.u32 %s45, %s46
      %p48 = scmp.eq.s32.totalorder %s47, 0
      %s50 = sadd.s32 %s49, 1
      %s51 = scalar_select %p48, %s49, %s50
      %p54 = pneg %p48
      %p55 = scmp.eq.s32.totalorder %s16, 3
      %p56 = por %p54, %p55
      %p57 = scmp.ne.s32.totalorder %s49, %s52
      %p58 = scmp.eq.s32.totalorder %s16, 0
      %p59 = por %p57, %p58
      %p60 = scmp.ne.s32.totalorder %s49, %s52
      %p61 = scmp.eq.s32.totalorder %s21, 3
      %p62 = por %p60, %p61
      %p63 = scmp.ne.s32.totalorder %s52, %s53
      %p64 = scmp.eq.s32.totalorder %s21, 0
      %p65 = por %p63, %p64
      %p66 = scmp.ne.s32.totalorder %s52, %s53
      %p67 = scmp.eq.s32.totalorder %s22, 3
      %p68 = por %p66, %p67
      %p70 = scmp.ne.s32.totalorder %s53, %s69
      %p71 = scmp.eq.s32.totalorder %s22, 0
      %p72 = por %p70, %p71
      %s74 = sadd.s32 %s73, 1
      %p77 = scmp.eq.s32.totalorder %s16, 3
      %p78 = scmp.ne.s32.totalorder %s73, %s75
      %p79 = scmp.eq.s32.totalorder %s16, 0
      %p80 = por %p78, %p79
      %p81 = scmp.ne.s32.totalorder %s73, %s75
      %p82 = scmp.eq.s32.totalorder %s21, 3
      %p83 = por %p81, %p82
      %p84 = scmp.ne.s32.totalorder %s75, %s76
      %p85 = scmp.eq.s32.totalorder %s21, 0
      %p86 = por %p84, %p85
      %p87 = scmp.ne.s32.totalorder %s75, %s76
      %p88 = scmp.eq.s32.totalorder %s22, 3
      %p89 = por %p87, %p88
      %p91 = scmp.ne.s32.totalorder %s76, %s90
      %p92 = scmp.eq.s32.totalorder %s22, 0
      %p93 = por %p91, %p92
      %s95 = sadd.s32 %s94, 1
      %p98 = scmp.eq.s32.totalorder %s16, 3
      %p99 = scmp.ne.s32.totalorder %s94, %s96
      %p100 = scmp.eq.s32.totalorder %s16, 0
      %p101 = por %p99, %p100
      %p102 = scmp.ne.s32.totalorder %s94, %s96
      %p103 = scmp.eq.s32.totalorder %s21, 3
      %p104 = por %p102, %p103
      %p105 = scmp.ne.s32.totalorder %s96, %s97
      %p106 = scmp.eq.s32.totalorder %s21, 0
      %p107 = por %p105, %p106
      %p108 = scmp.ne.s32.totalorder %s96, %s97
      %p109 = scmp.eq.s32.totalorder %s22, 3
      %p110 = por %p108, %p109
      %p112 = scmp.ne.s32.totalorder %s97, %s111
      %p113 = scmp.eq.s32.totalorder %s22, 0
      %p114 = por %p112, %p113
      %s116 = sadd.s32 %s115, 1
      %p119 = scmp.eq.s32.totalorder %s16, 3
      %p120 = scmp.ne.s32.totalorder %s115, %s117
      %p121 = scmp.eq.s32.totalorder %s16, 0
      %p122 = por %p120, %p121
      %p123 = scmp.ne.s32.totalorder %s115, %s117
      %p124 = scmp.eq.s32.totalorder %s21, 3
      %p125 = por %p123, %p124
      %p126 = scmp.ne.s32.totalorder %s117, %s118
      %p127 = scmp.eq.s32.totalorder %s21, 0
      %p128 = por %p126, %p127
      %p129 = scmp.ne.s32.totalorder %s117, %s118
      %p130 = scmp.eq.s32.totalorder %s22, 3
      %p131 = por %p129, %p130
      %p133 = scmp.ne.s32.totalorder %s118, %s132
      %p134 = scmp.eq.s32.totalorder %s22, 0
      %p135 = por %p133, %p134
      %s136 = ssub.s32 %s23, %s42
      %s137 = ssub.s32 %s24, %s38
      %s138 = sor.u32 %s136, %s137
      %p139 = scmp.eq.s32.totalorder %s138, 0
      %s141 = sadd.s32 %s140, 1
      %s142 = scalar_select %p139, %s140, %s141
      %p145 = pneg %p139
      %p146 = scmp.eq.s32.totalorder %s16, 3
      %p147 = por %p145, %p146
      %p148 = scmp.ne.s32.totalorder %s140, %s143
      %p149 = scmp.eq.s32.totalorder %s16, 0
      %p150 = por %p148, %p149
      %p151 = scmp.ne.s32.totalorder %s140, %s143
      %p152 = scmp.eq.s32.totalorder %s21, 3
      %p153 = por %p151, %p152
      %p154 = scmp.ne.s32.totalorder %s143, %s144
      %p155 = scmp.eq.s32.totalorder %s21, 0
      %p156 = por %p154, %p155
      %p157 = scmp.ne.s32.totalorder %s143, %s144
      %p158 = scmp.eq.s32.totalorder %s22, 3
      %p159 = por %p157, %p158
      %p161 = scmp.ne.s32.totalorder %s144, %s160
      %p162 = scmp.eq.s32.totalorder %s22, 0
      %p163 = por %p161, %p162
      %p164 = scmp.le.s32.totalorder 1, %s16
      %p165 = scmp.lt.s32.totalorder %s16, 5
      %p166 = pnand %p164, %p165
      %p167 = pneg %p166
      // Predicated region
      $region9: #{fcn_head_forward.1} parent=5 // pred_check
        _
      $region10: #{fcn_head_forward.1} parent=5 // pred_check_branch
        %169 = sbr.rel (%p166) target = $region12
      $region11: #{fcn_head_forward.1} parent=5 // pred_region
        %s170 = ssub.s32 %s16, 1
        // Predicated region
        $region13: #{fcn_head_forward.1} parent=11 // pred_check
          %p171 = pneg %p86
        $region14: #{fcn_head_forward.1} parent=11 // pred_check_branch
          %173 = sbr.rel (%p171) target = $region16
        $region15: #{fcn_head_forward.1} parent=11 // pred_region
          _
        $region16: #{fcn_head_forward.1} parent=11 // pred_fallthru
          _
        // Predicated region
        $region17: #{fcn_head_forward.1} parent=11 // pred_check
          %p174 = pneg %p107
        $region18: #{fcn_head_forward.1} parent=11 // pred_check_branch
          %176 = sbr.rel (%p174) target = $region20
        $region19: #{fcn_head_forward.1} parent=11 // pred_region
          _
        $region20: #{fcn_head_forward.1} parent=11 // pred_fallthru
          _
        // Predicated region
        $region21: #{fcn_head_forward.1} parent=11 // pred_check
          %p177 = pneg %p128
        $region22: #{fcn_head_forward.1} parent=11 // pred_check_branch
          %179 = sbr.rel (%p177) target = $region24
        $region23: #{fcn_head_forward.1} parent=11 // pred_region
          _
        $region24: #{fcn_head_forward.1} parent=11 // pred_fallthru
          _
      $region12: #{fcn_head_forward.1} parent=5 // pred_fallthru
        _
      %p180 = scmp.lt.s32.totalorder %s16, 4
      // Predicated region
      $region25: #{fcn_head_forward.1} parent=5 // pred_check
        %p181 = pneg %p180
      $region26: #{fcn_head_forward.1} parent=5 // pred_check_branch
        %183 = sbr.rel (%p181) target = $region28
      $region27: #{fcn_head_forward.1} parent=5 // pred_region
        // Predicated region
        $region29: #{fcn_head_forward.1} parent=27 // pred_check
          %p184 = pneg %p59
        $region30: #{fcn_head_forward.1} parent=27 // pred_check_branch
          %186 = sbr.rel (%p184) target = $region32
        $region31: #{fcn_head_forward.1} parent=27 // pred_region
          %s187 = sand.u32 %s49, 1
          %s188 = scalar_lea.sflag [#allocation4], %s187
          %s189 = sand.u32 %s49, 1
          %s190 = smul.addr %s189, 64
          %s191 = scalar_lea.vmem [#allocation3], %s190
          %s193 = ssub.s32 1024, 1024
          %194 = vsyncadd %s188, %s193
          %s195 = sadd.s32 %s24, %s25
          %s196 = smul.addr %s23, 16
          %s197 = sadd.s32 %s195, %s196
          %s198 = smul.addr %s197, 128
          %s199 = scalar_lea.hbm %s0, %s198
          %s200 = sshll.u32 %s191, 4
          %s201 = int_to_ptr.vmem [resolvable:$true] %s200
          %206 = dma.hbm_to_vmem [thread:$0]  %s199, 1024, %s201, %s188, 256, 128, 8
        $region32: #{fcn_head_forward.1} parent=27 // pred_fallthru
          _
      $region28: #{fcn_head_forward.1} parent=5 // pred_fallthru
        _
      %p207 = scmp.le.s32.totalorder 1, %s16
      %p208 = scmp.lt.s32.totalorder %s16, 5
      %p209 = pnand %p207, %p208
      %p210 = pneg %p209
      // Predicated region
      $region33: #{fcn_head_forward.1} parent=5 // pred_check
        _
      $region34: #{fcn_head_forward.1} parent=5 // pred_check_branch
        %212 = sbr.rel (%p209) target = $region36
      $region35: #{fcn_head_forward.1} parent=5 // pred_region
        %s213 = ssub.s32 %s16, 1
        %s214 = sand.u32 %s52, 1
        %s215 = scalar_lea.sflag [#allocation4], %s214
        %s216 = sand.u32 %s52, 1
        %s217 = smul.addr %s216, 64
        %s218 = scalar_lea.vmem [#allocation3], %s217
        // Predicated region
        $region37: #{fcn_head_forward.1} parent=35 // pred_check
          %p219 = pneg %p65
        $region38: #{fcn_head_forward.1} parent=35 // pred_check_branch
          %221 = sbr.rel (%p219) target = $region40
        $region39: #{fcn_head_forward.1} parent=35 // pred_region
          %222 = dma.done %s215, 1024
        $region40: #{fcn_head_forward.1} parent=35 // pred_fallthru
          _
        %s223 = sand.u32 %s52, 1
        %s224 = scalar_lea.sflag [#allocation4], %s223
        %s225 = sand.u32 %s52, 1
        %s226 = smul.addr %s225, 64
        %s227 = scalar_lea.vmem [#allocation3], %s226
        %p228 = pneg %p65
        %p229 = pneg %p62
        %p230 = pneg %p86
        %p231 = pneg %p83
        %p232 = pneg %p107
        %p233 = pneg %p104
        %p234 = pneg %p128
        %p235 = pneg %p125
        %p236 = pneg %p156
        %p237 = pneg %p153
        %s238 = sand.u32 %s143, 1
        %s239 = scalar_lea.sflag [#allocation5], %s238
        %s240 = sand.u32 %s143, 1
        %s241 = smul.addr %s240, 4
        %s242 = scalar_lea.vmem [#allocation6], %s241
        %p243 = scmp.eq.s32.totalorder %s28, 0
        // Predicated region
        $region41: #{fcn_head_forward.1} parent=35 // pred_check
          %p244 = pneg %p243
        $region42: #{fcn_head_forward.1} parent=35 // pred_check_branch
          %246 = sbr.rel (%p244) target = $region44
        $region43: #{fcn_head_forward.1} parent=35 // pred_region
          %vm247 = vcmask 123904
          %248 = vst.msk [vmem:[#allocation2] sm:$0x3] %vm247, 0.0
        $region44: #{fcn_head_forward.1} parent=35 // pred_fallthru
          _
        %v249 = vld [vmem:[%s218] sm:$0xff]
        %v250 = vld [vmem:[%s218 + $0x8] sm:$0xff]
        %v251 = vld [vmem:[%s218 + $0x10] sm:$0xff]
        %v252 = vld [vmem:[%s218 + $0x18] sm:$0xff]
        %v253 = vld [vmem:[%s218 + $0x20] sm:$0xff]
        %v254 = vld [vmem:[%s218 + $0x28] sm:$0xff]
        %v255 = vld [vmem:[%s218 + $0x30] sm:$0xff]
        %v256 = vld [vmem:[%s218 + $0x38] sm:$0xff]
        %vm257 = vcmask 130048
        %v258 = vsel %vm257, %v249, 0.0
        %v259 = vrot.slane %v258, 4
        %v260 = vadd.f32 %v258, %v259
        %v261 = vrot.slane %v260, 2
        %v262 = vadd.f32 %v260, %v261
        %v263 = vrot.slane %v262, 1
        %v264 = vadd.f32 %v262, %v263
        %v265 = vsel %vm257, %v250, 0.0
        %v266 = vrot.slane %v265, 4
        %v267 = vadd.f32 %v265, %v266
        %v268 = vrot.slane %v267, 2
        %v269 = vadd.f32 %v267, %v268
        %v270 = vrot.slane %v269, 1
        %v271 = vadd.f32 %v269, %v270
        %v272 = vsel %vm257, %v251, 0.0
        %v273 = vrot.slane %v272, 4
        %v274 = vadd.f32 %v272, %v273
        %v275 = vrot.slane %v274, 2
        %v276 = vadd.f32 %v274, %v275
        %v277 = vrot.slane %v276, 1
        %v278 = vadd.f32 %v276, %v277
        %v279 = vsel %vm257, %v252, 0.0
        %v280 = vrot.slane %v279, 4
        %v281 = vadd.f32 %v279, %v280
        %v282 = vrot.slane %v281, 2
        %v283 = vadd.f32 %v281, %v282
        %v284 = vrot.slane %v283, 1
        %v285 = vadd.f32 %v283, %v284
        %v286 = vsel %vm257, %v253, 0.0
        %v287 = vrot.slane %v286, 4
        %v288 = vadd.f32 %v286, %v287
        %v289 = vrot.slane %v288, 2
        %v290 = vadd.f32 %v288, %v289
        %v291 = vrot.slane %v290, 1
        %v292 = vadd.f32 %v290, %v291
        %v293 = vsel %vm257, %v254, 0.0
        %v294 = vrot.slane %v293, 4
        %v295 = vadd.f32 %v293, %v294
        %v296 = vrot.slane %v295, 2
        %v297 = vadd.f32 %v295, %v296
        %v298 = vrot.slane %v297, 1
        %v299 = vadd.f32 %v297, %v298
        %v300 = vsel %vm257, %v255, 0.0
        %v301 = vrot.slane %v300, 4
        %v302 = vadd.f32 %v300, %v301
        %v303 = vrot.slane %v302, 2
        %v304 = vadd.f32 %v302, %v303
        %v305 = vrot.slane %v304, 1
        %v306 = vadd.f32 %v304, %v305
        %v307 = vsel %vm257, %v256, 0.0
        %v308 = vrot.slane %v307, 4
        %v309 = vadd.f32 %v307, %v308
        %v310 = vrot.slane %v309, 2
        %v311 = vadd.f32 %v309, %v310
        %v312 = vrot.slane %v311, 1
        %v313 = vadd.f32 %v311, %v312
        %v314 = vld [vmem:[#allocation2] sm:$0x3]
        %v315 = vld [vmem:[%s1] sm:$0x3]
        %vm324 = vcmask 1041409
        %v325 = vsel %vm324, %v271, %v264
        %vm326 = vcmask 1042434
        %v327 = vsel %vm326, %v278, %v325
        %vm328 = vcmask 1043459
        %v329 = vsel %vm328, %v285, %v327
        %vm330 = vcmask 1044484
        %v331 = vsel %vm330, %v292, %v329
        %vm332 = vcmask 1045509
        %v333 = vsel %vm332, %v299, %v331
        %vm334 = vcmask 1046534
        %v335 = vsel %vm334, %v306, %v333
        %vm336 = vcmask 1047559
        %v337 = vsel %vm336, %v313, %v335
        %vm339 = vcmask 64512
        %v341 = vsel %vm339, %v315, 0
        %343 = vmatprep.subr.mxu0 0.0
        %344 = vmatpush1.msra.mxu0 %v337
        %345 = vmatprep.subr.mxu0 0.0
        %346 = vmatpush1.msra.mxu0 0.0
        %347 = vmatprep.subr.mxu0 0.0
        %348 = vmatpush1.msra.mxu0 0.0
        %349 = vmatprep.subr.mxu0 0.0
        %350 = vmatpush1.msra.mxu0 0.0
        %351 = vmatprep.subr.mxu0 0.0
        %352 = vmatpush1.msra.mxu0 0.0
        %353 = vmatprep.subr.mxu0 0.0
        %354 = vmatpush1.msra.mxu0 0.0
        %355 = vmatprep.subr.mxu0 0.0
        %356 = vmatpush1.msra.mxu0 0.0
        %357 = vmatprep.subr.mxu0 0.0
        %358 = vmatpush1.msra.mxu0 0.0
        %359 = vmatprep.subr.mxu0 0.0
        %360 = vmatpush1.msra.mxu0 0.0
        %361 = vmatprep.subr.mxu0 0.0
        %362 = vmatpush1.msra.mxu0 0.0
        %363 = vmatprep.subr.mxu0 0.0
        %364 = vmatpush1.msra.mxu0 0.0
        %365 = vmatprep.subr.mxu0 0.0
        %366 = vmatpush1.msra.mxu0 0.0
        %367 = vmatprep.subr.mxu0 0.0
        %368 = vmatpush1.msra.mxu0 0.0
        %369 = vmatprep.subr.mxu0 0.0
        %370 = vmatpush1.msra.mxu0 0.0
        %371 = vmatprep.subr.mxu0 0.0
        %372 = vmatpush1.msra.mxu0 0.0
        %373 = vmatprep.subr.mxu0 0.0
        %374 = vmatpush1.msra.mxu0 0.0
        %375 = vmatprep.subr.mxu0 0.0
        %376 = vmatpush1.msra.mxu0 0.0
        %377 = vmatprep.subr.mxu0 0.0
        %378 = vmatpush1.msra.mxu0 0.0
        %379 = vmatprep.subr.mxu0 0.0
        %380 = vmatpush1.msra.mxu0 0.0
        %381 = vmatprep.subr.mxu0 0.0
        %382 = vmatpush1.msra.mxu0 0.0
        %383 = vmatprep.subr.mxu0 0.0
        %384 = vmatpush1.msra.mxu0 0.0
        %385 = vmatprep.subr.mxu0 0.0
        %386 = vmatpush1.msra.mxu0 0.0
        %387 = vmatprep.subr.mxu0 0.0
        %388 = vmatpush1.msra.mxu0 0.0
        %389 = vmatprep.subr.mxu0 0.0
        %390 = vmatpush1.msra.mxu0 0.0
        %391 = vmatprep.subr.mxu0 0.0
        %392 = vmatpush1.msra.mxu0 0.0
        %393 = vmatprep.subr.mxu0 0.0
        %394 = vmatpush1.msra.mxu0 0.0
        %395 = vmatprep.subr.mxu0 0.0
        %396 = vmatpush1.msra.mxu0 0.0
        %397 = vmatprep.subr.mxu0 0.0
        %398 = vmatpush1.msra.mxu0 0.0
        %399 = vmatprep.subr.mxu0 0.0
        %400 = vmatpush1.msra.mxu0 0.0
        %401 = vmatprep.subr.mxu0 0.0
        %402 = vmatpush1.msra.mxu0 0.0
        %403 = vmatprep.subr.mxu0 0.0
        %404 = vmatpush1.msra.mxu0 0.0
        %405 = vmatprep.subr.mxu0 0.0
        %406 = vmatpush1.msra.mxu0 0.0
        %407 = vmatprep.mubr.f32.mxu0 0.0
        %408 = vmatmul.mubr.f32.gmra.mrb[0].mxu0 %v341
        %v409 = vpop.f32.mrb[0].mxu0
        %v410 = vadd.f32 0.0, %v409
        %v411 = vpop.f32.mrb[0].mxu0
        %412 = vdwg.mxu0
        %v413 = vadd.f32 %v314, %v410
        %vm414 = vcmask 123904
        %415 = vst.msk [vmem:[#allocation2] sm:$0x3] %vm414, %v413
        %p416 = scmp.eq.s32.totalorder %s28, 1
        // Predicated region
        $region45: #{fcn_head_forward.1} parent=35 // pred_check
          %p417 = pneg %p416
        $region46: #{fcn_head_forward.1} parent=35 // pred_check_branch
          %419 = sbr.rel (%p417) target = $region48
        $region47: #{fcn_head_forward.1} parent=35 // pred_region
          %v420 = vld [vmem:[#allocation2] sm:$0x3]
          %v421 = vld [vmem:[%s2] sm:$0x3]
          %423 = vset.pattern.permute.xlu0 0
          %424 = vperm.xlu0 %423, %v421
          %v425 = vpop.permute.xlu0 %424
          %v427 = vadd.f32 %v420, %v425
          %v428 = vmax.f32 %v427, 0.0
          %v429 = vld [vmem:[%s3] sm:$0xf]
          %vm430 = vcmask 15360
          %v432 = vsel %vm430, %v429, 0
          %vm434 = vcmask 1041408
          %v436 = vsel %vm434, %v428, 0
          %438 = vmatprep.subr.mxu0 0.0
          %439 = vmatpush1.msra.mxu0 %v436
          %440 = vmatprep.subr.mxu0 0.0
          %441 = vmatpush1.msra.mxu0 0.0
          %442 = vmatprep.subr.mxu0 0.0
          %443 = vmatpush1.msra.mxu0 0.0
          %444 = vmatprep.subr.mxu0 0.0
          %445 = vmatpush1.msra.mxu0 0.0
          %446 = vmatprep.subr.mxu0 0.0
          %447 = vmatpush1.msra.mxu0 0.0
          %448 = vmatprep.subr.mxu0 0.0
          %449 = vmatpush1.msra.mxu0 0.0
          %450 = vmatprep.subr.mxu0 0.0
          %451 = vmatpush1.msra.mxu0 0.0
          %452 = vmatprep.subr.mxu0 0.0
          %453 = vmatpush1.msra.mxu0 0.0
          %454 = vmatprep.subr.mxu0 0.0
          %455 = vmatpush1.msra.mxu0 0.0
          %456 = vmatprep.subr.mxu0 0.0
          %457 = vmatpush1.msra.mxu0 0.0
          %458 = vmatprep.subr.mxu0 0.0
          %459 = vmatpush1.msra.mxu0 0.0
          %460 = vmatprep.subr.mxu0 0.0
          %461 = vmatpush1.msra.mxu0 0.0
          %462 = vmatprep.subr.mxu0 0.0
          %463 = vmatpush1.msra.mxu0 0.0
          %464 = vmatprep.subr.mxu0 0.0
          %465 = vmatpush1.msra.mxu0 0.0
          %466 = vmatprep.subr.mxu0 0.0
          %467 = vmatpush1.msra.mxu0 0.0
          %468 = vmatprep.subr.mxu0 0.0
          %469 = vmatpush1.msra.mxu0 0.0
          %470 = vmatprep.subr.mxu0 0.0
          %471 = vmatpush1.msra.mxu0 0.0
          %472 = vmatprep.subr.mxu0 0.0
          %473 = vmatpush1.msra.mxu0 0.0
          %474 = vmatprep.subr.mxu0 0.0
          %475 = vmatpush1.msra.mxu0 0.0
          %476 = vmatprep.subr.mxu0 0.0
          %477 = vmatpush1.msra.mxu0 0.0
          %478 = vmatprep.subr.mxu0 0.0
          %479 = vmatpush1.msra.mxu0 0.0
          %480 = vmatprep.subr.mxu0 0.0
          %481 = vmatpush1.msra.mxu0 0.0
          %482 = vmatprep.subr.mxu0 0.0
          %483 = vmatpush1.msra.mxu0 0.0
          %484 = vmatprep.subr.mxu0 0.0
          %485 = vmatpush1.msra.mxu0 0.0
          %486 = vmatprep.subr.mxu0 0.0
          %487 = vmatpush1.msra.mxu0 0.0
          %488 = vmatprep.subr.mxu0 0.0
          %489 = vmatpush1.msra.mxu0 0.0
          %490 = vmatprep.subr.mxu0 0.0
          %491 = vmatpush1.msra.mxu0 0.0
          %492 = vmatprep.subr.mxu0 0.0
          %493 = vmatpush1.msra.mxu0 0.0
          %494 = vmatprep.subr.mxu0 0.0
          %495 = vmatpush1.msra.mxu0 0.0
          %496 = vmatprep.subr.mxu0 0.0
          %497 = vmatpush1.msra.mxu0 0.0
          %498 = vmatprep.subr.mxu0 0.0
          %499 = vmatpush1.msra.mxu0 0.0
          %500 = vmatprep.subr.mxu0 0.0
          %501 = vmatpush1.msra.mxu0 0.0
          %502 = vmatprep.mubr.f32.mxu0 0.0
          %503 = vmatmul.mubr.f32.gmra.mrb[0].mxu0 %v432
          %v504 = vpop.f32.mrb[0].mxu0
          %v505 = vadd.f32 0.0, %v504
          %v506 = vpop.f32.mrb[0].mxu0
          %507 = vdwg.mxu0
          %vm508 = vcmask 125952
          %509 = vst.msk [vmem:[%s242] sm:$0xf] %vm508, %v505
        $region48: #{fcn_head_forward.1} parent=35 // pred_fallthru
          _
        %s510 = sand.u32 %s143, 1
        %s511 = scalar_lea.sflag [#allocation5], %s510
        %s512 = sand.u32 %s143, 1
        %s513 = smul.addr %s512, 4
        %s514 = scalar_lea.vmem [#allocation6], %s513
        // Predicated region
        $region49: #{fcn_head_forward.1} parent=35 // pred_check
          %p515 = pneg %p153
        $region50: #{fcn_head_forward.1} parent=35 // pred_check_branch
          %517 = sbr.rel (%p515) target = $region52
        $region51: #{fcn_head_forward.1} parent=35 // pred_region
          %s519 = ssub.s32 64, 64
          %520 = vsyncadd %s511, %s519
          %s521 = sadd.s32 %s27, %s26
          %s522 = smul.addr %s521, 64
          %s523 = scalar_lea.hbm %s4, %s522
          %s525 = sshll.u32 %s514, 4
          %s526 = int_to_ptr.vmem [resolvable:$true] %s525
          %528 = dma.vmem_to_hbm [thread:$0]  %s526, 64, %s523, %s511
        $region52: #{fcn_head_forward.1} parent=35 // pred_fallthru
          _
      $region36: #{fcn_head_forward.1} parent=5 // pred_fallthru
        _
      %p529 = scmp.le.s32.totalorder 2, %s16
      // Predicated region
      $region53: #{fcn_head_forward.1} parent=5 // pred_check
        %p530 = pneg %p529
      $region54: #{fcn_head_forward.1} parent=5 // pred_check_branch
        %532 = sbr.rel (%p530) target = $region56
      $region55: #{fcn_head_forward.1} parent=5 // pred_region
        %s533 = ssub.s32 %s16, 2
        // Predicated region
        $region57: #{fcn_head_forward.1} parent=55 // pred_check
          %p534 = pneg %p159
        $region58: #{fcn_head_forward.1} parent=55 // pred_check_branch
          %536 = sbr.rel (%p534) target = $region60
        $region59: #{fcn_head_forward.1} parent=55 // pred_region
          %s537 = sand.u32 %s144, 1
          %s538 = scalar_lea.sflag [#allocation5], %s537
          %s539 = sand.u32 %s144, 1
          %s540 = smul.addr %s539, 4
          %s541 = scalar_lea.vmem [#allocation6], %s540
          %542 = dma.done %s538, 64
        $region60: #{fcn_head_forward.1} parent=55 // pred_fallthru
          _
      $region56: #{fcn_head_forward.1} parent=5 // pred_fallthru
        _
    $region6: #{fcn_head_forward.1} parent=1 // loop_footer
      %s20 = sadd.s32 1, %s16
    $region7: #{fcn_head_forward.1} parent=1 // loop_footer_branch
      %15 = sbr.rel target = $region3
    $region8: #{fcn_head_forward.1} parent=1 // loop_exit
      _
    %543 = vsyncpa [#allocation4], 1
    %s544 = scalar_lea.sflag [#allocation4], 1
    %545 = vsyncpa %s544, 1
    %546 = vsyncpa [#allocation5], 1
    %s547 = scalar_lea.sflag [#allocation5], 1
    %548 = vsyncpa %s547, 1

</llo_original>
